<compile_context>
chip_gen: v7x
topology: tpu7x:2x2x1
jax: 0.10.0
libtpu: 0.0.40
codegen_flags: <defaults>
</compile_context>

<pallas_src>
import jax
import jax.numpy as jnp
from jax import lax
from jax.experimental import pallas as pl
from jax.experimental.pallas import tpu as pltpu

FEAT = 128        # stands in for the 1000-dim DeiT head output (lane aligned, small)
NUM_CLASS = 2     # classifier = nn.Linear(1000, 2) -> Linear(FEAT, 2) here
LANE = 128        # lane-dense padded width for the classifier output
TK_MAX = 8192     # K-tile cap at real scale; re-sweep per generation (VMEM-limited)


def deit_attn_cls_forward(img, video, params, tk=None):
    """img: (1, Ni, C, H, W)   video: (1, Nv, C, H, W)  ->  (1, NUM_CLASS) logits."""
    img = jnp.squeeze(img, axis=0)        # (Ni, C, H, W)
    video = jnp.squeeze(video, axis=0)    # (Nv, C, H, W)
    ni = img.shape[0]
    nv = video.shape[0]
    chw = int(img.shape[1] * img.shape[2] * img.shape[3])

    # ---- scale-aware K tile: one grid step at toy size, capped at real scale ----
    chw128 = pl.cdiv(chw, 128) * 128
    if tk is None:
        tk = min(TK_MAX, chw128)
    tk = min(pl.cdiv(tk, 128) * 128, chw128)
    chw_pad = pl.cdiv(chw128, tk) * tk
    pad = chw_pad - chw
    kt = chw_pad // tk

    def pad_k(x, axis):
        if pad == 0:
            return x
        widths = [(0, 0)] * x.ndim
        widths[axis] = (0, pad)
        return jnp.pad(x, widths)

    # ---- hoisted, exact f32 image frame-mean (backbone stand-in is linear) ----
    vflat = video.reshape(nv, chw).astype(jnp.float32)
    img_mean = jnp.mean(img.reshape(ni, chw).astype(jnp.float32), axis=0, keepdims=True)
    x_all = pad_k(jnp.concatenate([vflat, img_mean], axis=0), 1).astype(jnp.bfloat16)

    # ---- merged weight / bias streams: [video-branch | img-branch] ----
    w_cat = jnp.concatenate([params["w_vbb"], params["w_ibb"]], axis=1)      # (chw, 2F)
    w_cat = pad_k(w_cat, 0).astype(jnp.bfloat16)
    b_cat = jnp.concatenate([params["b_vbb"], params["b_ibb"]], axis=1).astype(jnp.float32)

    # lane-dense classifier weights / bias: (F, 2) -> (F, 128)
    ncls = params["w_cls"].shape[1]
    wc_pad = jnp.pad(params["w_cls"], ((0, 0), (0, LANE - ncls))).astype(jnp.float32)
    bc_pad = jnp.pad(params["b_cls"], ((0, 0), (0, LANE - ncls))).astype(jnp.float32)

    nvp1 = nv + 1
    f2 = 2 * FEAT

    # ---- fused backbone + attention + classifier kernel (closure over nv) ----
    def kernel(x_ref, w_ref, b_ref, wc_ref, bc_ref, prob_ref, acc_ref):
        k = pl.program_id(0)
        nk = pl.num_programs(0)

        @pl.when(k == 0)
        def _():
            # fold the backbone biases into the accumulator init (added exactly once)
            acc_ref[...] = jnp.zeros_like(acc_ref) + b_ref[...]

        # (Nv+1, tk) @ (tk, 2F) -> f32 accumulator; rows 0..Nv-1 x cols :F are the
        # video features, row Nv x cols F: is the mean img feature (rest unused).
        acc_ref[...] += jnp.dot(x_ref[...], w_ref[...],
                                preferred_element_type=jnp.float32)

        @pl.when(k == nk - 1)
        def _():
            feats = acc_ref[...]                         # (Nv+1, 2F), biases included
            video_v = feats[:nv, :FEAT]                  # (Nv, F)  = Q and the V source
            k_mean = feats[nv:nv + 1, FEAT:]             # (1, F)   = mean over K's rows
            # mean(K @ Q^T, axis=0) == mean(K, 0) @ Q^T ; contract last dims directly
            a = lax.dot_general(k_mean, video_v,
                                dimension_numbers=(((1,), (1,)), ((), ())),
                                preferred_element_type=jnp.float32)     # (1, Nv)
            a_max = jnp.max(a, axis=1, keepdims=True)
            e = jnp.exp(a - a_max)
            attn = e / jnp.sum(e, axis=1, keepdims=True)                # exact softmax
            v = jnp.dot(attn, video_v, preferred_element_type=jnp.float32)   # (1, F)
            # classifier, lane-dense padded output (sliced to NUM_CLASS in the wrapper)
            prob_ref[...] = (jnp.dot(v, wc_ref[...], preferred_element_type=jnp.float32)
                             + bc_ref[...])

    # ---- VMEM budget derived from the actual double-buffered tile footprint ----
    sub16 = ((nvp1 + 15) // 16) * 16                      # bf16 sublane packing
    tile_bytes = 2 * (tk * f2 * 2)                        # 2-buffered weight tile (bf16)
    tile_bytes += 2 * (sub16 * tk * 2)                    # 2-buffered activation tile (bf16)
    vmem_limit = int(min(48 << 20, max(4 * tile_bytes, 32 << 20)))

    prob_pad = pl.pallas_call(
        kernel,
        out_shape=jax.ShapeDtypeStruct((1, LANE), jnp.float32),
        grid_spec=pltpu.PrefetchScalarGridSpec(
            num_scalar_prefetch=0,
            grid=(kt,),
            in_specs=[
                pl.BlockSpec((nvp1, tk), lambda k: (0, k)),     # [video ; img_mean] activations
                pl.BlockSpec((tk, f2), lambda k: (k, 0)),       # [w_vbb | w_ibb]
                pl.BlockSpec((1, f2), lambda k: (0, 0)),        # [b_vbb | b_ibb]
                pl.BlockSpec((FEAT, LANE), lambda k: (0, 0)),   # w_cls (padded)
                pl.BlockSpec((1, LANE), lambda k: (0, 0)),      # b_cls (padded)
            ],
            out_specs=pl.BlockSpec((1, LANE), lambda k: (0, 0)),
            scratch_shapes=[
                pltpu.VMEM((nvp1, f2), jnp.float32),            # fused feature accumulator
            ],
        ),
        compiler_params=pltpu.CompilerParams(
            dimension_semantics=("arbitrary",),                 # K axis is a reduction
            vmem_limit_bytes=vmem_limit,
        ),
    )(x_all, w_cat, b_cat, wc_pad, bc_pad)

    return prob_pad[:, :ncls]


def init_params(key, chw):
    k1, k2, k3, k4, k5, k6 = jax.random.split(key, 6)
    scale_bb = 1.0 / jnp.sqrt(jnp.float32(chw))
    scale_cls = 1.0 / jnp.sqrt(jnp.float32(FEAT))
    return {
        "w_vbb": jax.random.normal(k1, (chw, FEAT), jnp.float32) * scale_bb,
        "b_vbb": jax.random.normal(k2, (1, FEAT), jnp.float32) * 0.01,
        "w_ibb": jax.random.normal(k3, (chw, FEAT), jnp.float32) * scale_bb,
        "b_ibb": jax.random.normal(k4, (1, FEAT), jnp.float32) * 0.01,
        "w_cls": jax.random.normal(k5, (FEAT, NUM_CLASS), jnp.float32) * scale_cls,
        "b_cls": jax.random.normal(k6, (1, NUM_CLASS), jnp.float32) * 0.01,
    }


if __name__ == "__main__":
    key = jax.random.PRNGKey(0)
    k_img, k_vid, k_par = jax.random.split(key, 3)

    C, H, W = 4, 16, 16
    N_IMG, N_VID = 6, 8   # number of image frames / video frames after squeeze(0)

    img = jax.random.normal(k_img, (1, N_IMG, C, H, W), jnp.float32)
    video = jax.random.normal(k_vid, (1, N_VID, C, H, W), jnp.float32)
    params = init_params(k_par, C * H * W)

    prob = deit_attn_cls_forward(img, video, params)   # chw=1024 -> tk=1024, 1 grid step
    jax.block_until_ready(prob)

    assert prob.shape == (1, NUM_CLASS)
    assert bool(jnp.all(jnp.isfinite(prob)))
    print("KERNEL_OK")
</pallas_src>

<mosaic_0001>
module attributes {stable_mosaic.version = 11 : i64} {
  func.func @kernel(%arg0: i32, %arg1: memref<9x1024xbf16, #tpu.memory_space<vmem>>, %arg2: memref<1024x256xbf16, #tpu.memory_space<vmem>>, %arg3: memref<1x256xf32, #tpu.memory_space<vmem>>, %arg4: memref<128x128xf32, #tpu.memory_space<vmem>>, %arg5: memref<1x128xf32, #tpu.memory_space<vmem>>, %arg6: memref<1x128xf32, #tpu.memory_space<vmem>>, %arg7: memref<9x256xf32, #tpu.memory_space<vmem>>) attributes {dimension_semantics = [#tpu.dimension_semantics<arbitrary>], iteration_bounds = array<i64: 1>, scalar_prefetch = 0 : i64, scratch_operands = 1 : i64, tpu.core_type = #tpu.core_type<tc>, window_params = [{transform_indices = @transform_0, window_bounds = array<i64: 9, 1024>}, {transform_indices = @transform_1, window_bounds = array<i64: 1024, 256>}, {pipeline_mode = #tpu.pipeline_mode<synchronous>, transform_indices = @transform_2, window_bounds = array<i64: 1, 256>}, {pipeline_mode = #tpu.pipeline_mode<synchronous>, transform_indices = @transform_3, window_bounds = array<i64: 128, 128>}, {pipeline_mode = #tpu.pipeline_mode<synchronous>, transform_indices = @transform_4, window_bounds = array<i64: 1, 128>}, {pipeline_mode = #tpu.pipeline_mode<synchronous>, transform_indices = @transform_5, window_bounds = array<i64: 1, 128>}]} {
    %c0_i32 = arith.constant 0 : i32
    %0 = arith.cmpi eq, %arg0, %c0_i32 : i32
    %1 = arith.extui %0 : i1 to i32
    %c0_i32_0 = arith.constant 0 : i32
    %2 = arith.cmpi ne, %1, %c0_i32_0 : i32
    scf.if %2 {
      %cst_10 = arith.constant 0.000000e+00 : f32
      %12 = vector.broadcast %cst_10 : f32 to vector<9x256xf32>
      %c0_11 = arith.constant 0 : index
      %c0_12 = arith.constant 0 : index
      %13 = vector.load %arg3[%c0_11, %c0_12] : memref<1x256xf32, #tpu.memory_space<vmem>>, vector<1x256xf32>
      %14 = vector.broadcast %13 : vector<1x256xf32> to vector<9x256xf32>
      %15 = arith.addf %12, %14 : vector<9x256xf32>
      %c0_13 = arith.constant 0 : index
      %c0_14 = arith.constant 0 : index
      %16 = vector.load %arg7[%c0_13, %c0_14] : memref<9x256xf32, #tpu.memory_space<vmem>>, vector<9x256xf32>
      tpu.vector_store %arg7[%c0_13, %c0_14], %15 {strides = array<i32>} : memref<9x256xf32, #tpu.memory_space<vmem>>, vector<9x256xf32>,
    } else {
    }
    %c0 = arith.constant 0 : index
    %c0_1 = arith.constant 0 : index
    %3 = vector.load %arg7[%c0, %c0_1] : memref<9x256xf32, #tpu.memory_space<vmem>>, vector<9x256xf32>
    %c0_2 = arith.constant 0 : index
    %c0_3 = arith.constant 0 : index
    %4 = vector.load %arg1[%c0_2, %c0_3] : memref<9x1024xbf16, #tpu.memory_space<vmem>>, vector<9x1024xbf16>
    %c0_4 = arith.constant 0 : index
    %c0_5 = arith.constant 0 : index
    %5 = vector.load %arg2[%c0_4, %c0_5] : memref<1024x256xbf16, #tpu.memory_space<vmem>>, vector<1024x256xbf16>
    %cst = arith.constant dense<0.000000e+00> : vector<9x256xf32>
    %6 = tpu.matmul %4, %5, %cst {dimension_numbers = #tpu.dot_dimension_numbers<[1], [0], [0], [1], [0, 0, 1, 1], [], []>} : vector<9x1024xbf16>, vector<1024x256xbf16>, vector<9x256xf32> -> vector<9x256xf32>
    %7 = arith.addf %3, %6 : vector<9x256xf32>
    %c0_6 = arith.constant 0 : index
    %c0_7 = arith.constant 0 : index
    %8 = vector.load %arg7[%c0_6, %c0_7] : memref<9x256xf32, #tpu.memory_space<vmem>>, vector<9x256xf32>
    tpu.vector_store %arg7[%c0_6, %c0_7], %7 {strides = array<i32>} : memref<9x256xf32, #tpu.memory_space<vmem>>, vector<9x256xf32>,
    %c0_i32_8 = arith.constant 0 : i32
    %9 = arith.cmpi eq, %arg0, %c0_i32_8 : i32
    %10 = arith.extui %9 : i1 to i32
    %c0_i32_9 = arith.constant 0 : i32
    %11 = arith.cmpi ne, %10, %c0_i32_9 : i32
    scf.if %11 {
      %c0_10 = arith.constant 0 : index
      %c0_11 = arith.constant 0 : index
      %12 = vector.load %arg7[%c0_10, %c0_11] : memref<9x256xf32, #tpu.memory_space<vmem>>, vector<9x256xf32>
      %13 = vector.extract_strided_slice %12 {offsets = [0, 0], sizes = [8, 128], strides = [1, 1]} : vector<9x256xf32> to vector<8x128xf32>
      %14 = vector.extract_strided_slice %12 {offsets = [8, 128], sizes = [1, 128], strides = [1, 1]} : vector<9x256xf32> to vector<1x128xf32>
      %cst_12 = arith.constant dense<0.000000e+00> : vector<1x8xf32>
      %15 = tpu.matmul %14, %13, %cst_12 {dimension_numbers = #tpu.dot_dimension_numbers<[1], [1], [0], [0], [0, 0, 1, 0], [], []>} : vector<1x128xf32>, vector<8x128xf32>, vector<1x8xf32> -> vector<1x8xf32>
      %cst_13 = arith.constant dense<0xFF800000> : vector<1xf32>
      %16 = vector.multi_reduction <maximumf>, %15, %cst_13 [1] : vector<1x8xf32> to vector<1xf32>
      %17 = vector.shape_cast %16 : vector<1xf32> to vector<1x1xf32>
      %18 = vector.broadcast %17 : vector<1x1xf32> to vector<1x8xf32>
      %19 = arith.subf %15, %18 : vector<1x8xf32>
      %20 = math.exp %19 : vector<1x8xf32>
      %cst_14 = arith.constant dense<0.000000e+00> : vector<1xf32>
      %21 = vector.multi_reduction <add>, %20, %cst_14 [1] : vector<1x8xf32> to vector<1xf32>
      %22 = vector.shape_cast %21 : vector<1xf32> to vector<1x1xf32>
      %23 = vector.broadcast %22 : vector<1x1xf32> to vector<1x8xf32>
      %24 = arith.divf %20, %23 : vector<1x8xf32>
      %cst_15 = arith.constant dense<0.000000e+00> : vector<1x128xf32>
      %25 = tpu.matmul %24, %13, %cst_15 {dimension_numbers = #tpu.dot_dimension_numbers<[1], [0], [0], [1], [0, 0, 1, 1], [], []>} : vector<1x8xf32>, vector<8x128xf32>, vector<1x128xf32> -> vector<1x128xf32>
      %c0_16 = arith.constant 0 : index
      %c0_17 = arith.constant 0 : index
      %26 = vector.load %arg4[%c0_16, %c0_17] : memref<128x128xf32, #tpu.memory_space<vmem>>, vector<128x128xf32>
      %cst_18 = arith.constant dense<0.000000e+00> : vector<1x128xf32>
      %27 = tpu.matmul %25, %26, %cst_18 {dimension_numbers = #tpu.dot_dimension_numbers<[1], [0], [0], [1], [0, 0, 1, 1], [], []>} : vector<1x128xf32>, vector<128x128xf32>, vector<1x128xf32> -> vector<1x128xf32>
      %c0_19 = arith.constant 0 : index
      %c0_20 = arith.constant 0 : index
      %28 = vector.load %arg5[%c0_19, %c0_20] : memref<1x128xf32, #tpu.memory_space<vmem>>, vector<1x128xf32>
      %29 = arith.addf %27, %28 : vector<1x128xf32>
      %c0_21 = arith.constant 0 : index
      %c0_22 = arith.constant 0 : index
      %30 = vector.load %arg6[%c0_21, %c0_22] : memref<1x128xf32, #tpu.memory_space<vmem>>, vector<1x128xf32>
      tpu.vector_store %arg6[%c0_21, %c0_22], %29 {strides = array<i32>} : memref<1x128xf32, #tpu.memory_space<vmem>>, vector<1x128xf32>,
    } else {
    }
    return
  }
  func.func @transform_0(%arg0: i32) -> (i32, i32) {
    %c0_i32 = arith.constant 0 : i32
    %c0_i32_0 = arith.constant 0 : i32
    return %c0_i32, %arg0 : i32, i32
  }
  func.func @transform_1(%arg0: i32) -> (i32, i32) {
    %c0_i32 = arith.constant 0 : i32
    %c0_i32_0 = arith.constant 0 : i32
    return %arg0, %c0_i32 : i32, i32
  }
  func.func @transform_2(%arg0: i32) -> (i32, i32) {
    %c0_i32 = arith.constant 0 : i32
    %c0_i32_0 = arith.constant 0 : i32
    %c0_i32_1 = arith.constant 0 : i32
    return %c0_i32, %c0_i32_0 : i32, i32
  }
  func.func @transform_3(%arg0: i32) -> (i32, i32) {
    %c0_i32 = arith.constant 0 : i32
    %c0_i32_0 = arith.constant 0 : i32
    %c0_i32_1 = arith.constant 0 : i32
    return %c0_i32, %c0_i32_0 : i32, i32
  }
  func.func @transform_4(%arg0: i32) -> (i32, i32) {
    %c0_i32 = arith.constant 0 : i32
    %c0_i32_0 = arith.constant 0 : i32
    %c0_i32_1 = arith.constant 0 : i32
    return %c0_i32, %c0_i32_0 : i32, i32
  }
  func.func @transform_5(%arg0: i32) -> (i32, i32) {
    %c0_i32 = arith.constant 0 : i32
    %c0_i32_0 = arith.constant 0 : i32
    %c0_i32_1 = arith.constant 0 : i32
    return %c0_i32, %c0_i32_0 : i32, i32
  }
}

</mosaic_0001>

<llo_original>
// kernel: tpu_custom_call.1
$region0: #{tpu_custom_call.1}
  #allocation0 [shape = 'u32[]', space=smem, size = 0x4, offset = 0x4, fixed_abs, tag = 'smem constant byte address 0x4 - core index']
  #allocation1 [shape = 'u32[144,128]{1,0:T(1,128)}', space=vmem, size = 0x12000, scoped, tag = 'internal scratch']
  #allocation2 [shape = 'f32[9,256]{1,0:T(8,128)}', space=vmem, size = 0x4000, scoped, tag = 'scratch operand']
  %s0 = inlined_call_operand.hbm [shape: bf16[9,1024], index: 0, kind: input, shape index: {}]
  %s1 = inlined_call_operand.hbm [shape: bf16[1024,256], index: 1, kind: input, shape index: {}]
  %s2 = inlined_call_operand.vmem [shape: f32[1,256], index: 2, kind: input, shape index: {}]
  %s3 = inlined_call_operand.hbm [shape: f32[128,128], index: 3, kind: input, shape index: {}]
  %s4 = inlined_call_operand.vmem [shape: f32[1,128], index: 4, kind: input, shape index: {}]
  %s5 = inlined_call_operand.hbm [shape: f32[1,128], index: 5, kind: output, shape index: {}]
  %s6 = sld [smem:[#allocation0]]
  $region50: #{tpu_custom_call.1} parent=0
    _
  %s8 = ssub.s32 1, %s6
  %s9 = scalar_select 0, %s8, %s6
  $region1: #{tpu_custom_call.1} parent=0
    #allocation3 [shape = 'u8[32768]{0}', space=vmem, size = 0x8000, scoped, tag = 'input window, operand 0, single buffered']
    #allocation4 [shape = 's32[1]{0}', space=sflag, size = 0x4, scoped, tag = 'scoped memory for tpu_custom_call.1']
    #allocation5 [shape = 's32[1]{0}', space=sflag, size = 0x4, scoped, tag = 'scoped memory for tpu_custom_call.1']
    #allocation6 [shape = 'u8[524288]{0}', space=vmem, size = 0x80000, scoped, tag = 'input window, operand 1, single buffered']
    #allocation7 [shape = 's32[1]{0}', space=sflag, size = 0x4, scoped, tag = 'scoped memory for tpu_custom_call.1']
    #allocation8 [shape = 'u8[65536]{0}', space=vmem, size = 0x10000, scoped, tag = 'input window, operand 3, single buffered']
    #allocation9 [shape = 'u8[512]{0}', space=vmem, size = 0x400, scoped, tag = 'output window, operand 0, single buffered']
    %10 = vsyncpa [#allocation4], 0
    %11 = vsyncpa [#allocation7], 0
    %12 = vsyncpa [#allocation5], 0
    // Predicated region
    $region2: #{tpu_custom_call.1} parent=1 // pred_check
      _
    $region3: #{tpu_custom_call.1} parent=1 // pred_check_branch
      %14 = sbr.rel (0) target = $region5
    $region4: #{tpu_custom_call.1} parent=1 // pred_region
      %s16 = ssub.s32 1024, 1024
      %17 = vsyncadd [#allocation4], %s16
      %s18 = sshll.u32 [#allocation3], 4
      %s19 = int_to_ptr.vmem [resolvable:$true] %s18
      %24 = dma.hbm_to_vmem [thread:$0]  %s0, 1024, %s19, [#allocation4], 512, 512, 32
    $region5: #{tpu_custom_call.1} parent=1 // pred_fallthru
      _
    // Predicated region
    $region6: #{tpu_custom_call.1} parent=1 // pred_check
      _
    $region7: #{tpu_custom_call.1} parent=1 // pred_check_branch
      %26 = sbr.rel (0) target = $region9
    $region8: #{tpu_custom_call.1} parent=1 // pred_region
      %s28 = ssub.s32 16384, 16384
      %29 = vsyncadd [#allocation7], %s28
      %s30 = sshll.u32 [#allocation6], 4
      %s31 = int_to_ptr.vmem [resolvable:$true] %s30
      %36 = dma.hbm_to_vmem [thread:$0]  %s1, 16384, %s31, [#allocation7], 128, 128, 8
    $region9: #{tpu_custom_call.1} parent=1 // pred_fallthru
      _
    // Predicated region
    $region10: #{tpu_custom_call.1} parent=1 // pred_check
      _
    $region11: #{tpu_custom_call.1} parent=1 // pred_check_branch
      %38 = sbr.rel (0) target = $region13
    $region12: #{tpu_custom_call.1} parent=1 // pred_region
      _
    $region13: #{tpu_custom_call.1} parent=1 // pred_fallthru
      _
    // Predicated region
    $region14: #{tpu_custom_call.1} parent=1 // pred_check
      _
    $region15: #{tpu_custom_call.1} parent=1 // pred_check_branch
      %40 = sbr.rel (0) target = $region17
    $region16: #{tpu_custom_call.1} parent=1 // pred_region
      %s42 = ssub.s32 2048, 2048
      %43 = vsyncadd [#allocation7], %s42
      %s44 = sshll.u32 [#allocation8], 4
      %s45 = int_to_ptr.vmem [resolvable:$true] %s44
      %50 = dma.hbm_to_vmem [thread:$0]  %s3, 2048, %s45, [#allocation7], 128, 128, 8
    $region17: #{tpu_custom_call.1} parent=1 // pred_fallthru
      _
    // Predicated region
    $region18: #{tpu_custom_call.1} parent=1 // pred_check
      _
    $region19: #{tpu_custom_call.1} parent=1 // pred_check_branch
      %52 = sbr.rel (0) target = $region21
    $region20: #{tpu_custom_call.1} parent=1 // pred_region
      _
    $region21: #{tpu_custom_call.1} parent=1 // pred_fallthru
      _
    // Predicated region
    $region22: #{tpu_custom_call.1} parent=1 // pred_check
      _
    $region23: #{tpu_custom_call.1} parent=1 // pred_check_branch
      %54 = sbr.rel (0) target = $region25
    $region24: #{tpu_custom_call.1} parent=1 // pred_region
      %55 = dma.done [#allocation4], 1024
    $region25: #{tpu_custom_call.1} parent=1 // pred_fallthru
      _
    // Predicated region
    $region26: #{tpu_custom_call.1} parent=1 // pred_check
      _
    $region27: #{tpu_custom_call.1} parent=1 // pred_check_branch
      %57 = sbr.rel (0) target = $region29
    $region28: #{tpu_custom_call.1} parent=1 // pred_region
      %58 = dma.done [#allocation7], 16384
    $region29: #{tpu_custom_call.1} parent=1 // pred_fallthru
      _
    // Predicated region
    $region30: #{tpu_custom_call.1} parent=1 // pred_check
      _
    $region31: #{tpu_custom_call.1} parent=1 // pred_check_branch
      %60 = sbr.rel (0) target = $region33
    $region32: #{tpu_custom_call.1} parent=1 // pred_region
      %61 = dma.done [#allocation7], 2048
    $region33: #{tpu_custom_call.1} parent=1 // pred_fallthru
      _
    %p62 = scmp.eq.s32.totalorder 0, 0
    // Predicated region
    $region34: #{tpu_custom_call.1} parent=1 // pred_check
      %p63 = pneg %p62
    $region35: #{tpu_custom_call.1} parent=1 // pred_check_branch
      %65 = sbr.rel (%p63) target = $region37
    $region36: #{tpu_custom_call.1} parent=1 // pred_region
      %v66 = vld [vmem:[%s2] sm:$0x3]
      %v68 = vlaneseq
      %v69 = vshrl.u32 %v68, 7
      %v70 = vsub.s32 0, %v69
      %v71 = vrot.slane %v66, %v70
      %v72 = vlaneseq
      %v73 = vshrl.u32 %v72, 7
      %v74 = vsub.s32 1, %v73
      %v75 = vrot.slane %v66, %v74
      %v78 = vadd.f32 %v71, 0.0
      %v79 = vadd.f32 %v75, 0.0
      %80 = vst [vmem:[#allocation2] sm:$0xff] %v78
      %81 = vst [vmem:[#allocation2 + $0x8] sm:$0xff] %v79
      %82 = vst [vmem:[#allocation2 + $0x10] sm:$0x1] %v78
      %83 = vst [vmem:[#allocation2 + $0x18] sm:$0x1] %v79
    $region37: #{tpu_custom_call.1} parent=1 // pred_fallthru
      _
    %v84 = vld [vmem:[#allocation2] sm:$0xff]
    %v85 = vld [vmem:[#allocation2 + $0x8] sm:$0xff]
    %v86 = vld [vmem:[#allocation2 + $0x10] sm:$0x1]
    %v87 = vld [vmem:[#allocation2 + $0x18] sm:$0x1]
    %v88 = vld [vmem:[#allocation3] sm:$0xff]
    %v89 = vld [vmem:[#allocation3 + $0x8] sm:$0xff]
    %v90 = vld [vmem:[#allocation3 + $0x10] sm:$0xff]
    %v91 = vld [vmem:[#allocation3 + $0x18] sm:$0xff]
    %v92 = vld [vmem:[#allocation3 + $0x20] sm:$0x11]
    %v93 = vld [vmem:[#allocation3 + $0x28] sm:$0x11]
    %v94 = vld [vmem:[#allocation3 + $0x30] sm:$0x11]
    %v95 = vld [vmem:[#allocation3 + $0x38] sm:$0x11]
    %v96 = vld [vmem:[#allocation6] sm:$0xff]
    %v97 = vld [vmem:[#allocation6 + $0x8] sm:$0xff]
    %v98 = vld [vmem:[#allocation6 + $0x10] sm:$0xff]
    %v99 = vld [vmem:[#allocation6 + $0x18] sm:$0xff]
    %v100 = vld [vmem:[#allocation6 + $0x20] sm:$0xff]
    %v101 = vld [vmem:[#allocation6 + $0x28] sm:$0xff]
    %v102 = vld [vmem:[#allocation6 + $0x30] sm:$0xff]
    %v103 = vld [vmem:[#allocation6 + $0x38] sm:$0xff]
    %v104 = vld [vmem:[#allocation6 + $0x40] sm:$0xff]
    %v105 = vld [vmem:[#allocation6 + $0x48] sm:$0xff]
    %v106 = vld [vmem:[#allocation6 + $0x50] sm:$0xff]
    %v107 = vld [vmem:[#allocation6 + $0x58] sm:$0xff]
    %v108 = vld [vmem:[#allocation6 + $0x60] sm:$0xff]
    %v109 = vld [vmem:[#allocation6 + $0x68] sm:$0xff]
    %v110 = vld [vmem:[#allocation6 + $0x70] sm:$0xff]
    %v111 = vld [vmem:[#allocation6 + $0x78] sm:$0xff]
    %v112 = vld [vmem:[#allocation6 + $0x80] sm:$0xff]
    %v113 = vld [vmem:[#allocation6 + $0x88] sm:$0xff]
    %v114 = vld [vmem:[#allocation6 + $0x90] sm:$0xff]
    %v115 = vld [vmem:[#allocation6 + $0x98] sm:$0xff]
    %v116 = vld [vmem:[#allocation6 + $0xa0] sm:$0xff]
    %v117 = vld [vmem:[#allocation6 + $0xa8] sm:$0xff]
    %v118 = vld [vmem:[#allocation6 + $0xb0] sm:$0xff]
    %v119 = vld [vmem:[#allocation6 + $0xb8] sm:$0xff]
    %v120 = vld [vmem:[#allocation6 + $0xc0] sm:$0xff]
    %v121 = vld [vmem:[#allocation6 + $0xc8] sm:$0xff]
    %v122 = vld [vmem:[#allocation6 + $0xd0] sm:$0xff]
    %v123 = vld [vmem:[#allocation6 + $0xd8] sm:$0xff]
    %v124 = vld [vmem:[#allocation6 + $0xe0] sm:$0xff]
    %v125 = vld [vmem:[#allocation6 + $0xe8] sm:$0xff]
    %v126 = vld [vmem:[#allocation6 + $0xf0] sm:$0xff]
    %v127 = vld [vmem:[#allocation6 + $0xf8] sm:$0xff]
    %v128 = vld [vmem:[#allocation6 + $0x100] sm:$0xff]
    %v129 = vld [vmem:[#allocation6 + $0x108] sm:$0xff]
    %v130 = vld [vmem:[#allocation6 + $0x110] sm:$0xff]
    %v131 = vld [vmem:[#allocation6 + $0x118] sm:$0xff]
    %v132 = vld [vmem:[#allocation6 + $0x120] sm:$0xff]
    %v133 = vld [vmem:[#allocation6 + $0x128] sm:$0xff]
    %v134 = vld [vmem:[#allocation6 + $0x130] sm:$0xff]
    %v135 = vld [vmem:[#allocation6 + $0x138] sm:$0xff]
    %v136 = vld [vmem:[#allocation6 + $0x140] sm:$0xff]
    %v137 = vld [vmem:[#allocation6 + $0x148] sm:$0xff]
    %v138 = vld [vmem:[#allocation6 + $0x150] sm:$0xff]
    %v139 = vld [vmem:[#allocation6 + $0x158] sm:$0xff]
    %v140 = vld [vmem:[#allocation6 + $0x160] sm:$0xff]
    %v141 = vld [vmem:[#allocation6 + $0x168] sm:$0xff]
    %v142 = vld [vmem:[#allocation6 + $0x170] sm:$0xff]
    %v143 = vld [vmem:[#allocation6 + $0x178] sm:$0xff]
    %v144 = vld [vmem:[#allocation6 + $0x180] sm:$0xff]
    %v145 = vld [vmem:[#allocation6 + $0x188] sm:$0xff]
    %v146 = vld [vmem:[#allocation6 + $0x190] sm:$0xff]
    %v147 = vld [vmem:[#allocation6 + $0x198] sm:$0xff]
    %v148 = vld [vmem:[#allocation6 + $0x1a0] sm:$0xff]
    %v149 = vld [vmem:[#allocation6 + $0x1a8] sm:$0xff]
    %v150 = vld [vmem:[#allocation6 + $0x1b0] sm:$0xff]
    %v151 = vld [vmem:[#allocation6 + $0x1b8] sm:$0xff]
    %v152 = vld [vmem:[#allocation6 + $0x1c0] sm:$0xff]
    %v153 = vld [vmem:[#allocation6 + $0x1c8] sm:$0xff]
    %v154 = vld [vmem:[#allocation6 + $0x1d0] sm:$0xff]
    %v155 = vld [vmem:[#allocation6 + $0x1d8] sm:$0xff]
    %v156 = vld [vmem:[#allocation6 + $0x1e0] sm:$0xff]
    %v157 = vld [vmem:[#allocation6 + $0x1e8] sm:$0xff]
    %v158 = vld [vmem:[#allocation6 + $0x1f0] sm:$0xff]
    %v159 = vld [vmem:[#allocation6 + $0x1f8] sm:$0xff]
    %v160 = vld [vmem:[#allocation6 + $0x200] sm:$0xff]
    %v161 = vld [vmem:[#allocation6 + $0x208] sm:$0xff]
    %v162 = vld [vmem:[#allocation6 + $0x210] sm:$0xff]
    %v163 = vld [vmem:[#allocation6 + $0x218] sm:$0xff]
    %v164 = vld [vmem:[#allocation6 + $0x220] sm:$0xff]
    %v165 = vld [vmem:[#allocation6 + $0x228] sm:$0xff]
    %v166 = vld [vmem:[#allocation6 + $0x230] sm:$0xff]
    %v167 = vld [vmem:[#allocation6 + $0x238] sm:$0xff]
    %v168 = vld [vmem:[#allocation6 + $0x240] sm:$0xff]
    %v169 = vld [vmem:[#allocation6 + $0x248] sm:$0xff]
    %v170 = vld [vmem:[#allocation6 + $0x250] sm:$0xff]
    %v171 = vld [vmem:[#allocation6 + $0x258] sm:$0xff]
    %v172 = vld [vmem:[#allocation6 + $0x260] sm:$0xff]
    %v173 = vld [vmem:[#allocation6 + $0x268] sm:$0xff]
    %v174 = vld [vmem:[#allocation6 + $0x270] sm:$0xff]
    %v175 = vld [vmem:[#allocation6 + $0x278] sm:$0xff]
    %v176 = vld [vmem:[#allocation6 + $0x280] sm:$0xff]
    %v177 = vld [vmem:[#allocation6 + $0x288] sm:$0xff]
    %v178 = vld [vmem:[#allocation6 + $0x290] sm:$0xff]
    %v179 = vld [vmem:[#allocation6 + $0x298] sm:$0xff]
    %v180 = vld [vmem:[#allocation6 + $0x2a0] sm:$0xff]
    %v181 = vld [vmem:[#allocation6 + $0x2a8] sm:$0xff]
    %v182 = vld [vmem:[#allocation6 + $0x2b0] sm:$0xff]
    %v183 = vld [vmem:[#allocation6 + $0x2b8] sm:$0xff]
    %v184 = vld [vmem:[#allocation6 + $0x2c0] sm:$0xff]
    %v185 = vld [vmem:[#allocation6 + $0x2c8] sm:$0xff]
    %v186 = vld [vmem:[#allocation6 + $0x2d0] sm:$0xff]
    %v187 = vld [vmem:[#allocation6 + $0x2d8] sm:$0xff]
    %v188 = vld [vmem:[#allocation6 + $0x2e0] sm:$0xff]
    %v189 = vld [vmem:[#allocation6 + $0x2e8] sm:$0xff]
    %v190 = vld [vmem:[#allocation6 + $0x2f0] sm:$0xff]
    %v191 = vld [vmem:[#allocation6 + $0x2f8] sm:$0xff]
    %v192 = vld [vmem:[#allocation6 + $0x300] sm:$0xff]
    %v193 = vld [vmem:[#allocation6 + $0x308] sm:$0xff]
    %v194 = vld [vmem:[#allocation6 + $0x310] sm:$0xff]
    %v195 = vld [vmem:[#allocation6 + $0x318] sm:$0xff]
    %v196 = vld [vmem:[#allocation6 + $0x320] sm:$0xff]
    %v197 = vld [vmem:[#allocation6 + $0x328] sm:$0xff]
    %v198 = vld [vmem:[#allocation6 + $0x330] sm:$0xff]
    %v199 = vld [vmem:[#allocation6 + $0x338] sm:$0xff]
    %v200 = vld [vmem:[#allocation6 + $0x340] sm:$0xff]
    %v201 = vld [vmem:[#allocation6 + $0x348] sm:$0xff]
    %v202 = vld [vmem:[#allocation6 + $0x350] sm:$0xff]
    %v203 = vld [vmem:[#allocation6 + $0x358] sm:$0xff]
    %v204 = vld [vmem:[#allocation6 + $0x360] sm:$0xff]
    %v205 = vld [vmem:[#allocation6 + $0x368] sm:$0xff]
    %v206 = vld [vmem:[#allocation6 + $0x370] sm:$0xff]
    %v207 = vld [vmem:[#allocation6 + $0x378] sm:$0xff]
    %v208 = vld [vmem:[#allocation6 + $0x380] sm:$0xff]
    %v209 = vld [vmem:[#allocation6 + $0x388] sm:$0xff]
    %v210 = vld [vmem:[#allocation6 + $0x390] sm:$0xff]
    %v211 = vld [vmem:[#allocation6 + $0x398] sm:$0xff]
    %v212 = vld [vmem:[#allocation6 + $0x3a0] sm:$0xff]
    %v213 = vld [vmem:[#allocation6 + $0x3a8] sm:$0xff]
    %v214 = vld [vmem:[#allocation6 + $0x3b0] sm:$0xff]
    %v215 = vld [vmem:[#allocation6 + $0x3b8] sm:$0xff]
    %v216 = vld [vmem:[#allocation6 + $0x3c0] sm:$0xff]
    %v217 = vld [vmem:[#allocation6 + $0x3c8] sm:$0xff]
    %v218 = vld [vmem:[#allocation6 + $0x3d0] sm:$0xff]
    %v219 = vld [vmem:[#allocation6 + $0x3d8] sm:$0xff]
    %v220 = vld [vmem:[#allocation6 + $0x3e0] sm:$0xff]
    %v221 = vld [vmem:[#allocation6 + $0x3e8] sm:$0xff]
    %v222 = vld [vmem:[#allocation6 + $0x3f0] sm:$0xff]
    %v223 = vld [vmem:[#allocation6 + $0x3f8] sm:$0xff]
    %v232 = vunpack.c.l.b16 %v88
    %v233 = vunpack.c.h.b16 %v88
    %v234 = vunpack.c.l.b16 %v89
    %v235 = vunpack.c.h.b16 %v89
    %v236 = vunpack.c.l.b16 %v90
    %v237 = vunpack.c.h.b16 %v90
    %v238 = vunpack.c.l.b16 %v91
    %v239 = vunpack.c.h.b16 %v91
    %v240 = vunpack.c.l.b16 %v92
    %v241 = vunpack.c.h.b16 %v92
    %v242 = vunpack.c.l.b16 %v93
    %v243 = vunpack.c.h.b16 %v93
    %v244 = vunpack.c.l.b16 %v94
    %v245 = vunpack.c.h.b16 %v94
    %v246 = vunpack.c.l.b16 %v95
    %v247 = vunpack.c.h.b16 %v95
    %v248 = vpack.c.b16 %v240, %v232
    %v249 = vpack.c.b16 %v241, %v233
    %v250 = vpack.c.b16 %v242, %v234
    %v251 = vpack.c.b16 %v243, %v235
    %v252 = vpack.c.b16 %v244, %v236
    %v253 = vpack.c.b16 %v245, %v237
    %v254 = vpack.c.b16 %v246, %v238
    %v255 = vpack.c.b16 %v247, %v239
    %v392 = vunpack.c.l.b16 %v96
    %v393 = vunpack.c.h.b16 %v96
    %v394 = vunpack.c.l.b16 %v97
    %v395 = vunpack.c.h.b16 %v97
    %v396 = vunpack.c.l.b16 %v98
    %v397 = vunpack.c.h.b16 %v98
    %v398 = vunpack.c.l.b16 %v99
    %v399 = vunpack.c.h.b16 %v99
    %v400 = vunpack.c.l.b16 %v100
    %v401 = vunpack.c.h.b16 %v100
    %v402 = vunpack.c.l.b16 %v101
    %v403 = vunpack.c.h.b16 %v101
    %v404 = vunpack.c.l.b16 %v102
    %v405 = vunpack.c.h.b16 %v102
    %v406 = vunpack.c.l.b16 %v103
    %v407 = vunpack.c.h.b16 %v103
    %v408 = vunpack.c.l.b16 %v104
    %v409 = vunpack.c.h.b16 %v104
    %v410 = vunpack.c.l.b16 %v105
    %v411 = vunpack.c.h.b16 %v105
    %v412 = vunpack.c.l.b16 %v106
    %v413 = vunpack.c.h.b16 %v106
    %v414 = vunpack.c.l.b16 %v107
    %v415 = vunpack.c.h.b16 %v107
    %v416 = vunpack.c.l.b16 %v108
    %v417 = vunpack.c.h.b16 %v108
    %v418 = vunpack.c.l.b16 %v109
    %v419 = vunpack.c.h.b16 %v109
    %v420 = vunpack.c.l.b16 %v110
    %v421 = vunpack.c.h.b16 %v110
    %v422 = vunpack.c.l.b16 %v111
    %v423 = vunpack.c.h.b16 %v111
    %v424 = vunpack.c.l.b16 %v112
    %v425 = vunpack.c.h.b16 %v112
    %v426 = vunpack.c.l.b16 %v113
    %v427 = vunpack.c.h.b16 %v113
    %v428 = vunpack.c.l.b16 %v114
    %v429 = vunpack.c.h.b16 %v114
    %v430 = vunpack.c.l.b16 %v115
    %v431 = vunpack.c.h.b16 %v115
    %v432 = vunpack.c.l.b16 %v116
    %v433 = vunpack.c.h.b16 %v116
    %v434 = vunpack.c.l.b16 %v117
    %v435 = vunpack.c.h.b16 %v117
    %v436 = vunpack.c.l.b16 %v118
    %v437 = vunpack.c.h.b16 %v118
    %v438 = vunpack.c.l.b16 %v119
    %v439 = vunpack.c.h.b16 %v119
    %v440 = vunpack.c.l.b16 %v120
    %v441 = vunpack.c.h.b16 %v120
    %v442 = vunpack.c.l.b16 %v121
    %v443 = vunpack.c.h.b16 %v121
    %v444 = vunpack.c.l.b16 %v122
    %v445 = vunpack.c.h.b16 %v122
    %v446 = vunpack.c.l.b16 %v123
    %v447 = vunpack.c.h.b16 %v123
    %v448 = vunpack.c.l.b16 %v124
    %v449 = vunpack.c.h.b16 %v124
    %v450 = vunpack.c.l.b16 %v125
    %v451 = vunpack.c.h.b16 %v125
    %v452 = vunpack.c.l.b16 %v126
    %v453 = vunpack.c.h.b16 %v126
    %v454 = vunpack.c.l.b16 %v127
    %v455 = vunpack.c.h.b16 %v127
    %v456 = vunpack.c.l.b16 %v128
    %v457 = vunpack.c.h.b16 %v128
    %v458 = vunpack.c.l.b16 %v129
    %v459 = vunpack.c.h.b16 %v129
    %v460 = vunpack.c.l.b16 %v130
    %v461 = vunpack.c.h.b16 %v130
    %v462 = vunpack.c.l.b16 %v131
    %v463 = vunpack.c.h.b16 %v131
    %v464 = vunpack.c.l.b16 %v132
    %v465 = vunpack.c.h.b16 %v132
    %v466 = vunpack.c.l.b16 %v133
    %v467 = vunpack.c.h.b16 %v133
    %v468 = vunpack.c.l.b16 %v134
    %v469 = vunpack.c.h.b16 %v134
    %v470 = vunpack.c.l.b16 %v135
    %v471 = vunpack.c.h.b16 %v135
    %v472 = vunpack.c.l.b16 %v136
    %v473 = vunpack.c.h.b16 %v136
    %v474 = vunpack.c.l.b16 %v137
    %v475 = vunpack.c.h.b16 %v137
    %v476 = vunpack.c.l.b16 %v138
    %v477 = vunpack.c.h.b16 %v138
    %v478 = vunpack.c.l.b16 %v139
    %v479 = vunpack.c.h.b16 %v139
    %v480 = vunpack.c.l.b16 %v140
    %v481 = vunpack.c.h.b16 %v140
    %v482 = vunpack.c.l.b16 %v141
    %v483 = vunpack.c.h.b16 %v141
    %v484 = vunpack.c.l.b16 %v142
    %v485 = vunpack.c.h.b16 %v142
    %v486 = vunpack.c.l.b16 %v143
    %v487 = vunpack.c.h.b16 %v143
    %v488 = vunpack.c.l.b16 %v144
    %v489 = vunpack.c.h.b16 %v144
    %v490 = vunpack.c.l.b16 %v145
    %v491 = vunpack.c.h.b16 %v145
    %v492 = vunpack.c.l.b16 %v146
    %v493 = vunpack.c.h.b16 %v146
    %v494 = vunpack.c.l.b16 %v147
    %v495 = vunpack.c.h.b16 %v147
    %v496 = vunpack.c.l.b16 %v148
    %v497 = vunpack.c.h.b16 %v148
    %v498 = vunpack.c.l.b16 %v149
    %v499 = vunpack.c.h.b16 %v149
    %v500 = vunpack.c.l.b16 %v150
    %v501 = vunpack.c.h.b16 %v150
    %v502 = vunpack.c.l.b16 %v151
    %v503 = vunpack.c.h.b16 %v151
    %v504 = vunpack.c.l.b16 %v152
    %v505 = vunpack.c.h.b16 %v152
    %v506 = vunpack.c.l.b16 %v153
    %v507 = vunpack.c.h.b16 %v153
    %v508 = vunpack.c.l.b16 %v154
    %v509 = vunpack.c.h.b16 %v154
    %v510 = vunpack.c.l.b16 %v155
    %v511 = vunpack.c.h.b16 %v155
    %v512 = vunpack.c.l.b16 %v156
    %v513 = vunpack.c.h.b16 %v156
    %v514 = vunpack.c.l.b16 %v157
    %v515 = vunpack.c.h.b16 %v157
    %v516 = vunpack.c.l.b16 %v158
    %v517 = vunpack.c.h.b16 %v158
    %v518 = vunpack.c.l.b16 %v159
    %v519 = vunpack.c.h.b16 %v159
    %v520 = vunpack.c.l.b16 %v160
    %v521 = vunpack.c.h.b16 %v160
    %v522 = vunpack.c.l.b16 %v161
    %v523 = vunpack.c.h.b16 %v161
    %v524 = vunpack.c.l.b16 %v162
    %v525 = vunpack.c.h.b16 %v162
    %v526 = vunpack.c.l.b16 %v163
    %v527 = vunpack.c.h.b16 %v163
    %v528 = vunpack.c.l.b16 %v164
    %v529 = vunpack.c.h.b16 %v164
    %v530 = vunpack.c.l.b16 %v165
    %v531 = vunpack.c.h.b16 %v165
    %v532 = vunpack.c.l.b16 %v166
    %v533 = vunpack.c.h.b16 %v166
    %v534 = vunpack.c.l.b16 %v167
    %v535 = vunpack.c.h.b16 %v167
    %v536 = vunpack.c.l.b16 %v168
    %v537 = vunpack.c.h.b16 %v168
    %v538 = vunpack.c.l.b16 %v169
    %v539 = vunpack.c.h.b16 %v169
    %v540 = vunpack.c.l.b16 %v170
    %v541 = vunpack.c.h.b16 %v170
    %v542 = vunpack.c.l.b16 %v171
    %v543 = vunpack.c.h.b16 %v171
    %v544 = vunpack.c.l.b16 %v172
    %v545 = vunpack.c.h.b16 %v172
    %v546 = vunpack.c.l.b16 %v173
    %v547 = vunpack.c.h.b16 %v173
    %v548 = vunpack.c.l.b16 %v174
    %v549 = vunpack.c.h.b16 %v174
    %v550 = vunpack.c.l.b16 %v175
    %v551 = vunpack.c.h.b16 %v175
    %v552 = vunpack.c.l.b16 %v176
    %v553 = vunpack.c.h.b16 %v176
    %v554 = vunpack.c.l.b16 %v177
    %v555 = vunpack.c.h.b16 %v177
    %v556 = vunpack.c.l.b16 %v178
    %v557 = vunpack.c.h.b16 %v178
    %v558 = vunpack.c.l.b16 %v179
    %v559 = vunpack.c.h.b16 %v179
    %v560 = vunpack.c.l.b16 %v180
    %v561 = vunpack.c.h.b16 %v180
    %v562 = vunpack.c.l.b16 %v181
    %v563 = vunpack.c.h.b16 %v181
    %v564 = vunpack.c.l.b16 %v182
    %v565 = vunpack.c.h.b16 %v182
    %v566 = vunpack.c.l.b16 %v183
    %v567 = vunpack.c.h.b16 %v183
    %v568 = vunpack.c.l.b16 %v184
    %v569 = vunpack.c.h.b16 %v184
    %v570 = vunpack.c.l.b16 %v185
    %v571 = vunpack.c.h.b16 %v185
    %v572 = vunpack.c.l.b16 %v186
    %v573 = vunpack.c.h.b16 %v186
    %v574 = vunpack.c.l.b16 %v187
    %v575 = vunpack.c.h.b16 %v187
    %v576 = vunpack.c.l.b16 %v188
    %v577 = vunpack.c.h.b16 %v188
    %v578 = vunpack.c.l.b16 %v189
    %v579 = vunpack.c.h.b16 %v189
    %v580 = vunpack.c.l.b16 %v190
    %v581 = vunpack.c.h.b16 %v190
    %v582 = vunpack.c.l.b16 %v191
    %v583 = vunpack.c.h.b16 %v191
    %v584 = vunpack.c.l.b16 %v192
    %v585 = vunpack.c.h.b16 %v192
    %v586 = vunpack.c.l.b16 %v193
    %v587 = vunpack.c.h.b16 %v193
    %v588 = vunpack.c.l.b16 %v194
    %v589 = vunpack.c.h.b16 %v194
    %v590 = vunpack.c.l.b16 %v195
    %v591 = vunpack.c.h.b16 %v195
    %v592 = vunpack.c.l.b16 %v196
    %v593 = vunpack.c.h.b16 %v196
    %v594 = vunpack.c.l.b16 %v197
    %v595 = vunpack.c.h.b16 %v197
    %v596 = vunpack.c.l.b16 %v198
    %v597 = vunpack.c.h.b16 %v198
    %v598 = vunpack.c.l.b16 %v199
    %v599 = vunpack.c.h.b16 %v199
    %v600 = vunpack.c.l.b16 %v200
    %v601 = vunpack.c.h.b16 %v200
    %v602 = vunpack.c.l.b16 %v201
    %v603 = vunpack.c.h.b16 %v201
    %v604 = vunpack.c.l.b16 %v202
    %v605 = vunpack.c.h.b16 %v202
    %v606 = vunpack.c.l.b16 %v203
    %v607 = vunpack.c.h.b16 %v203
    %v608 = vunpack.c.l.b16 %v204
    %v609 = vunpack.c.h.b16 %v204
    %v610 = vunpack.c.l.b16 %v205
    %v611 = vunpack.c.h.b16 %v205
    %v612 = vunpack.c.l.b16 %v206
    %v613 = vunpack.c.h.b16 %v206
    %v614 = vunpack.c.l.b16 %v207
    %v615 = vunpack.c.h.b16 %v207
    %v616 = vunpack.c.l.b16 %v208
    %v617 = vunpack.c.h.b16 %v208
    %v618 = vunpack.c.l.b16 %v209
    %v619 = vunpack.c.h.b16 %v209
    %v620 = vunpack.c.l.b16 %v210
    %v621 = vunpack.c.h.b16 %v210
    %v622 = vunpack.c.l.b16 %v211
    %v623 = vunpack.c.h.b16 %v211
    %v624 = vunpack.c.l.b16 %v212
    %v625 = vunpack.c.h.b16 %v212
    %v626 = vunpack.c.l.b16 %v213
    %v627 = vunpack.c.h.b16 %v213
    %v628 = vunpack.c.l.b16 %v214
    %v629 = vunpack.c.h.b16 %v214
    %v630 = vunpack.c.l.b16 %v215
    %v631 = vunpack.c.h.b16 %v215
    %v632 = vunpack.c.l.b16 %v216
    %v633 = vunpack.c.h.b16 %v216
    %v634 = vunpack.c.l.b16 %v217
    %v635 = vunpack.c.h.b16 %v217
    %v636 = vunpack.c.l.b16 %v218
    %v637 = vunpack.c.h.b16 %v218
    %v638 = vunpack.c.l.b16 %v219
    %v639 = vunpack.c.h.b16 %v219
    %v640 = vunpack.c.l.b16 %v220
    %v641 = vunpack.c.h.b16 %v220
    %v642 = vunpack.c.l.b16 %v221
    %v643 = vunpack.c.h.b16 %v221
    %v644 = vunpack.c.l.b16 %v222
    %v645 = vunpack.c.h.b16 %v222
    %v646 = vunpack.c.l.b16 %v223
    %v647 = vunpack.c.h.b16 %v223
    %v648 = vpack.c.b16 %v394, %v392
    %v649 = vpack.c.b16 %v395, %v393
    %v650 = vpack.c.b16 %v398, %v396
    %v651 = vpack.c.b16 %v399, %v397
    %v652 = vpack.c.b16 %v402, %v400
    %v653 = vpack.c.b16 %v403, %v401
    %v654 = vpack.c.b16 %v406, %v404
    %v655 = vpack.c.b16 %v407, %v405
    %v656 = vpack.c.b16 %v410, %v408
    %v657 = vpack.c.b16 %v411, %v409
    %v658 = vpack.c.b16 %v414, %v412
    %v659 = vpack.c.b16 %v415, %v413
    %v660 = vpack.c.b16 %v418, %v416
    %v661 = vpack.c.b16 %v419, %v417
    %v662 = vpack.c.b16 %v422, %v420
    %v663 = vpack.c.b16 %v423, %v421
    %v664 = vpack.c.b16 %v426, %v424
    %v665 = vpack.c.b16 %v427, %v425
    %v666 = vpack.c.b16 %v430, %v428
    %v667 = vpack.c.b16 %v431, %v429
    %v668 = vpack.c.b16 %v434, %v432
    %v669 = vpack.c.b16 %v435, %v433
    %v670 = vpack.c.b16 %v438, %v436
    %v671 = vpack.c.b16 %v439, %v437
    %v672 = vpack.c.b16 %v442, %v440
    %v673 = vpack.c.b16 %v443, %v441
    %v674 = vpack.c.b16 %v446, %v444
    %v675 = vpack.c.b16 %v447, %v445
    %v676 = vpack.c.b16 %v450, %v448
    %v677 = vpack.c.b16 %v451, %v449
    %v678 = vpack.c.b16 %v454, %v452
    %v679 = vpack.c.b16 %v455, %v453
    %v680 = vpack.c.b16 %v458, %v456
    %v681 = vpack.c.b16 %v459, %v457
    %v682 = vpack.c.b16 %v462, %v460
    %v683 = vpack.c.b16 %v463, %v461
    %v684 = vpack.c.b16 %v466, %v464
    %v685 = vpack.c.b16 %v467, %v465
    %v686 = vpack.c.b16 %v470, %v468
    %v687 = vpack.c.b16 %v471, %v469
    %v688 = vpack.c.b16 %v474, %v472
    %v689 = vpack.c.b16 %v475, %v473
    %v690 = vpack.c.b16 %v478, %v476
    %v691 = vpack.c.b16 %v479, %v477
    %v692 = vpack.c.b16 %v482, %v480
    %v693 = vpack.c.b16 %v483, %v481
    %v694 = vpack.c.b16 %v486, %v484
    %v695 = vpack.c.b16 %v487, %v485
    %v696 = vpack.c.b16 %v490, %v488
    %v697 = vpack.c.b16 %v491, %v489
    %v698 = vpack.c.b16 %v494, %v492
    %v699 = vpack.c.b16 %v495, %v493
    %v700 = vpack.c.b16 %v498, %v496
    %v701 = vpack.c.b16 %v499, %v497
    %v702 = vpack.c.b16 %v502, %v500
    %v703 = vpack.c.b16 %v503, %v501
    %v704 = vpack.c.b16 %v506, %v504
    %v705 = vpack.c.b16 %v507, %v505
    %v706 = vpack.c.b16 %v510, %v508
    %v707 = vpack.c.b16 %v511, %v509
    %v708 = vpack.c.b16 %v514, %v512
    %v709 = vpack.c.b16 %v515, %v513
    %v710 = vpack.c.b16 %v518, %v516
    %v711 = vpack.c.b16 %v519, %v517
    %v712 = vpack.c.b16 %v522, %v520
    %v713 = vpack.c.b16 %v523, %v521
    %v714 = vpack.c.b16 %v526, %v524
    %v715 = vpack.c.b16 %v527, %v525
    %v716 = vpack.c.b16 %v530, %v528
    %v717 = vpack.c.b16 %v531, %v529
    %v718 = vpack.c.b16 %v534, %v532
    %v719 = vpack.c.b16 %v535, %v533
    %v720 = vpack.c.b16 %v538, %v536
    %v721 = vpack.c.b16 %v539, %v537
    %v722 = vpack.c.b16 %v542, %v540
    %v723 = vpack.c.b16 %v543, %v541
    %v724 = vpack.c.b16 %v546, %v544
    %v725 = vpack.c.b16 %v547, %v545
    %v726 = vpack.c.b16 %v550, %v548
    %v727 = vpack.c.b16 %v551, %v549
    %v728 = vpack.c.b16 %v554, %v552
    %v729 = vpack.c.b16 %v555, %v553
    %v730 = vpack.c.b16 %v558, %v556
    %v731 = vpack.c.b16 %v559, %v557
    %v732 = vpack.c.b16 %v562, %v560
    %v733 = vpack.c.b16 %v563, %v561
    %v734 = vpack.c.b16 %v566, %v564
    %v735 = vpack.c.b16 %v567, %v565
    %v736 = vpack.c.b16 %v570, %v568
    %v737 = vpack.c.b16 %v571, %v569
    %v738 = vpack.c.b16 %v574, %v572
    %v739 = vpack.c.b16 %v575, %v573
    %v740 = vpack.c.b16 %v578, %v576
    %v741 = vpack.c.b16 %v579, %v577
    %v742 = vpack.c.b16 %v582, %v580
    %v743 = vpack.c.b16 %v583, %v581
    %v744 = vpack.c.b16 %v586, %v584
    %v745 = vpack.c.b16 %v587, %v585
    %v746 = vpack.c.b16 %v590, %v588
    %v747 = vpack.c.b16 %v591, %v589
    %v748 = vpack.c.b16 %v594, %v592
    %v749 = vpack.c.b16 %v595, %v593
    %v750 = vpack.c.b16 %v598, %v596
    %v751 = vpack.c.b16 %v599, %v597
    %v752 = vpack.c.b16 %v602, %v600
    %v753 = vpack.c.b16 %v603, %v601
    %v754 = vpack.c.b16 %v606, %v604
    %v755 = vpack.c.b16 %v607, %v605
    %v756 = vpack.c.b16 %v610, %v608
    %v757 = vpack.c.b16 %v611, %v609
    %v758 = vpack.c.b16 %v614, %v612
    %v759 = vpack.c.b16 %v615, %v613
    %v760 = vpack.c.b16 %v618, %v616
    %v761 = vpack.c.b16 %v619, %v617
    %v762 = vpack.c.b16 %v622, %v620
    %v763 = vpack.c.b16 %v623, %v621
    %v764 = vpack.c.b16 %v626, %v624
    %v765 = vpack.c.b16 %v627, %v625
    %v766 = vpack.c.b16 %v630, %v628
    %v767 = vpack.c.b16 %v631, %v629
    %v768 = vpack.c.b16 %v634, %v632
    %v769 = vpack.c.b16 %v635, %v633
    %v770 = vpack.c.b16 %v638, %v636
    %v771 = vpack.c.b16 %v639, %v637
    %v772 = vpack.c.b16 %v642, %v640
    %v773 = vpack.c.b16 %v643, %v641
    %v774 = vpack.c.b16 %v646, %v644
    %v775 = vpack.c.b16 %v647, %v645
    %904 = vmatprep.subr.bf16.mxu0 %v649
    %905 = vmatpush1.bf16.msra.mxu0 %v648
    %906 = vmatprep.subr.bf16.mxu0 %v651
    %907 = vmatpush1.bf16.msra.mxu0 %v650
    %908 = vmatprep.subr.bf16.mxu0 %v653
    %909 = vmatpush1.bf16.msra.mxu0 %v652
    %910 = vmatprep.subr.bf16.mxu0 %v655
    %911 = vmatpush1.bf16.msra.mxu0 %v654
    %912 = vmatprep.subr.bf16.mxu0 %v657
    %913 = vmatpush1.bf16.msra.mxu0 %v656
    %914 = vmatprep.subr.bf16.mxu0 %v659
    %915 = vmatpush1.bf16.msra.mxu0 %v658
    %916 = vmatprep.subr.bf16.mxu0 %v661
    %917 = vmatpush1.bf16.msra.mxu0 %v660
    %918 = vmatprep.subr.bf16.mxu0 %v663
    %919 = vmatpush1.bf16.msra.mxu0 %v662
    %920 = vmatprep.subr.bf16.mxu0 %v665
    %921 = vmatpush1.bf16.msra.mxu0 %v664
    %922 = vmatprep.subr.bf16.mxu0 %v667
    %923 = vmatpush1.bf16.msra.mxu0 %v666
    %924 = vmatprep.subr.bf16.mxu0 %v669
    %925 = vmatpush1.bf16.msra.mxu0 %v668
    %926 = vmatprep.subr.bf16.mxu0 %v671
    %927 = vmatpush1.bf16.msra.mxu0 %v670
    %928 = vmatprep.subr.bf16.mxu0 %v673
    %929 = vmatpush1.bf16.msra.mxu0 %v672
    %930 = vmatprep.subr.bf16.mxu0 %v675
    %931 = vmatpush1.bf16.msra.mxu0 %v674
    %932 = vmatprep.subr.bf16.mxu0 %v677
    %933 = vmatpush1.bf16.msra.mxu0 %v676
    %934 = vmatprep.subr.bf16.mxu0 %v679
    %935 = vmatpush1.bf16.msra.mxu0 %v678
    %936 = vmatprep.mubr.bf16.mxu0 %v249
    %937 = vmatmul.mubr.bf16.gmra.mrb[0].mxu0 %v248
    %v938 = vpop.f32.mrb[0].mxu0
    %v939 = vadd.f32 0.0, %v938
    %v940 = vpop.f32.mrb[0].mxu0
    %v941 = vadd.f32 0.0, %v940
    %v942 = vpop.f32.mrb[0].mxu0
    %v943 = vadd.f32 0.0, %v942
    %v944 = vpop.f32.mrb[0].mxu0
    %v945 = vadd.f32 0.0, %v944
    %946 = vdwg.mxu0
    %947 = vmatprep.subr.bf16.mxu0 %v681
    %948 = vmatpush1.bf16.msra.mxu0 %v680
    %949 = vmatprep.subr.bf16.mxu0 %v683
    %950 = vmatpush1.bf16.msra.mxu0 %v682
    %951 = vmatprep.subr.bf16.mxu0 %v685
    %952 = vmatpush1.bf16.msra.mxu0 %v684
    %953 = vmatprep.subr.bf16.mxu0 %v687
    %954 = vmatpush1.bf16.msra.mxu0 %v686
    %955 = vmatprep.subr.bf16.mxu0 %v689
    %956 = vmatpush1.bf16.msra.mxu0 %v688
    %957 = vmatprep.subr.bf16.mxu0 %v691
    %958 = vmatpush1.bf16.msra.mxu0 %v690
    %959 = vmatprep.subr.bf16.mxu0 %v693
    %960 = vmatpush1.bf16.msra.mxu0 %v692
    %961 = vmatprep.subr.bf16.mxu0 %v695
    %962 = vmatpush1.bf16.msra.mxu0 %v694
    %963 = vmatprep.subr.bf16.mxu0 %v697
    %964 = vmatpush1.bf16.msra.mxu0 %v696
    %965 = vmatprep.subr.bf16.mxu0 %v699
    %966 = vmatpush1.bf16.msra.mxu0 %v698
    %967 = vmatprep.subr.bf16.mxu0 %v701
    %968 = vmatpush1.bf16.msra.mxu0 %v700
    %969 = vmatprep.subr.bf16.mxu0 %v703
    %970 = vmatpush1.bf16.msra.mxu0 %v702
    %971 = vmatprep.subr.bf16.mxu0 %v705
    %972 = vmatpush1.bf16.msra.mxu0 %v704
    %973 = vmatprep.subr.bf16.mxu0 %v707
    %974 = vmatpush1.bf16.msra.mxu0 %v706
    %975 = vmatprep.subr.bf16.mxu0 %v709
    %976 = vmatpush1.bf16.msra.mxu0 %v708
    %977 = vmatprep.subr.bf16.mxu0 %v711
    %978 = vmatpush1.bf16.msra.mxu0 %v710
    %979 = vmatprep.mubr.bf16.mxu0 %v251
    %980 = vmatmul.mubr.bf16.gmra.mrb[0].mxu0 %v250
    %v981 = vpop.f32.mrb[0].mxu0
    %v982 = vadd.f32 %v939, %v981
    %v983 = vpop.f32.mrb[0].mxu0
    %v984 = vadd.f32 %v941, %v983
    %v985 = vpop.f32.mrb[0].mxu0
    %v986 = vadd.f32 %v943, %v985
    %v987 = vpop.f32.mrb[0].mxu0
    %v988 = vadd.f32 %v945, %v987
    %989 = vdwg.mxu0
    %990 = vmatprep.subr.bf16.mxu0 %v713
    %991 = vmatpush1.bf16.msra.mxu0 %v712
    %992 = vmatprep.subr.bf16.mxu0 %v715
    %993 = vmatpush1.bf16.msra.mxu0 %v714
    %994 = vmatprep.subr.bf16.mxu0 %v717
    %995 = vmatpush1.bf16.msra.mxu0 %v716
    %996 = vmatprep.subr.bf16.mxu0 %v719
    %997 = vmatpush1.bf16.msra.mxu0 %v718
    %998 = vmatprep.subr.bf16.mxu0 %v721
    %999 = vmatpush1.bf16.msra.mxu0 %v720
    %1000 = vmatprep.subr.bf16.mxu0 %v723
    %1001 = vmatpush1.bf16.msra.mxu0 %v722
    %1002 = vmatprep.subr.bf16.mxu0 %v725
    %1003 = vmatpush1.bf16.msra.mxu0 %v724
    %1004 = vmatprep.subr.bf16.mxu0 %v727
    %1005 = vmatpush1.bf16.msra.mxu0 %v726
    %1006 = vmatprep.subr.bf16.mxu0 %v729
    %1007 = vmatpush1.bf16.msra.mxu0 %v728
    %1008 = vmatprep.subr.bf16.mxu0 %v731
    %1009 = vmatpush1.bf16.msra.mxu0 %v730
    %1010 = vmatprep.subr.bf16.mxu0 %v733
    %1011 = vmatpush1.bf16.msra.mxu0 %v732
    %1012 = vmatprep.subr.bf16.mxu0 %v735
    %1013 = vmatpush1.bf16.msra.mxu0 %v734
    %1014 = vmatprep.subr.bf16.mxu0 %v737
    %1015 = vmatpush1.bf16.msra.mxu0 %v736
    %1016 = vmatprep.subr.bf16.mxu0 %v739
    %1017 = vmatpush1.bf16.msra.mxu0 %v738
    %1018 = vmatprep.subr.bf16.mxu0 %v741
    %1019 = vmatpush1.bf16.msra.mxu0 %v740
    %1020 = vmatprep.subr.bf16.mxu0 %v743
    %1021 = vmatpush1.bf16.msra.mxu0 %v742
    %1022 = vmatprep.mubr.bf16.mxu0 %v253
    %1023 = vmatmul.mubr.bf16.gmra.mrb[0].mxu0 %v252
    %v1024 = vpop.f32.mrb[0].mxu0
    %v1025 = vadd.f32 %v982, %v1024
    %v1026 = vpop.f32.mrb[0].mxu0
    %v1027 = vadd.f32 %v984, %v1026
    %v1028 = vpop.f32.mrb[0].mxu0
    %v1029 = vadd.f32 %v986, %v1028
    %v1030 = vpop.f32.mrb[0].mxu0
    %v1031 = vadd.f32 %v988, %v1030
    %1032 = vdwg.mxu0
    %1033 = vmatprep.subr.bf16.mxu0 %v745
    %1034 = vmatpush1.bf16.msra.mxu0 %v744
    %1035 = vmatprep.subr.bf16.mxu0 %v747
    %1036 = vmatpush1.bf16.msra.mxu0 %v746
    %1037 = vmatprep.subr.bf16.mxu0 %v749
    %1038 = vmatpush1.bf16.msra.mxu0 %v748
    %1039 = vmatprep.subr.bf16.mxu0 %v751
    %1040 = vmatpush1.bf16.msra.mxu0 %v750
    %1041 = vmatprep.subr.bf16.mxu0 %v753
    %1042 = vmatpush1.bf16.msra.mxu0 %v752
    %1043 = vmatprep.subr.bf16.mxu0 %v755
    %1044 = vmatpush1.bf16.msra.mxu0 %v754
    %1045 = vmatprep.subr.bf16.mxu0 %v757
    %1046 = vmatpush1.bf16.msra.mxu0 %v756
    %1047 = vmatprep.subr.bf16.mxu0 %v759
    %1048 = vmatpush1.bf16.msra.mxu0 %v758
    %1049 = vmatprep.subr.bf16.mxu0 %v761
    %1050 = vmatpush1.bf16.msra.mxu0 %v760
    %1051 = vmatprep.subr.bf16.mxu0 %v763
    %1052 = vmatpush1.bf16.msra.mxu0 %v762
    %1053 = vmatprep.subr.bf16.mxu0 %v765
    %1054 = vmatpush1.bf16.msra.mxu0 %v764
    %1055 = vmatprep.subr.bf16.mxu0 %v767
    %1056 = vmatpush1.bf16.msra.mxu0 %v766
    %1057 = vmatprep.subr.bf16.mxu0 %v769
    %1058 = vmatpush1.bf16.msra.mxu0 %v768
    %1059 = vmatprep.subr.bf16.mxu0 %v771
    %1060 = vmatpush1.bf16.msra.mxu0 %v770
    %1061 = vmatprep.subr.bf16.mxu0 %v773
    %1062 = vmatpush1.bf16.msra.mxu0 %v772
    %1063 = vmatprep.subr.bf16.mxu0 %v775
    %1064 = vmatpush1.bf16.msra.mxu0 %v774
    %1065 = vmatprep.mubr.bf16.mxu0 %v255
    %1066 = vmatmul.mubr.bf16.gmra.mrb[0].mxu0 %v254
    %v1067 = vpop.f32.mrb[0].mxu0
    %v1068 = vadd.f32 %v1025, %v1067
    %v1069 = vpop.f32.mrb[0].mxu0
    %v1070 = vadd.f32 %v1027, %v1069
    %v1071 = vpop.f32.mrb[0].mxu0
    %v1072 = vadd.f32 %v1029, %v1071
    %v1073 = vpop.f32.mrb[0].mxu0
    %v1074 = vadd.f32 %v1031, %v1073
    %1075 = vdwg.mxu0
    %v1076 = vadd.f32 %v84, %v1068
    %v1077 = vadd.f32 %v85, %v1070
    %v1078 = vadd.f32 %v86, %v1072
    %v1079 = vadd.f32 %v87, %v1074
    %1080 = vst [vmem:[#allocation2] sm:$0xff] %v1076
    %1081 = vst [vmem:[#allocation2 + $0x8] sm:$0xff] %v1077
    %1082 = vst [vmem:[#allocation2 + $0x10] sm:$0x1] %v1078
    %1083 = vst [vmem:[#allocation2 + $0x18] sm:$0x1] %v1079
    // Predicated region
    $region38: #{tpu_custom_call.1} parent=1 // pred_check
      %p1084 = pneg %p62
    $region39: #{tpu_custom_call.1} parent=1 // pred_check_branch
      %1086 = sbr.rel (%p1084) target = $region41
    $region40: #{tpu_custom_call.1} parent=1 // pred_region
      %v1087 = vld [vmem:[#allocation2] sm:$0xff]
      %v1088 = vld [vmem:[#allocation2 + $0x18] sm:$0x1]
      %1089 = vmatprep.subr.mxu0 0.0
      %1090 = vmatpush1.xpose.msra.mxu0 %v1087
      %1091 = vmatprep.subr.mxu0 0.0
      %1092 = vmatpush1.xpose.msra.mxu0 0.0
      %1093 = vmatprep.subr.mxu0 0.0
      %1094 = vmatpush1.xpose.msra.mxu0 0.0
      %1095 = vmatprep.subr.mxu0 0.0
      %1096 = vmatpush1.xpose.msra.mxu0 0.0
      %1097 = vmatprep.subr.mxu0 0.0
      %1098 = vmatpush1.xpose.msra.mxu0 0.0
      %1099 = vmatprep.subr.mxu0 0.0
      %1100 = vmatpush1.xpose.msra.mxu0 0.0
      %1101 = vmatprep.subr.mxu0 0.0
      %1102 = vmatpush1.xpose.msra.mxu0 0.0
      %1103 = vmatprep.subr.mxu0 0.0
      %1104 = vmatpush1.xpose.msra.mxu0 0.0
      %1105 = vmatprep.subr.mxu0 0.0
      %1106 = vmatpush1.xpose.msra.mxu0 0.0
      %1107 = vmatprep.subr.mxu0 0.0
      %1108 = vmatpush1.xpose.msra.mxu0 0.0
      %1109 = vmatprep.subr.mxu0 0.0
      %1110 = vmatpush1.xpose.msra.mxu0 0.0
      %1111 = vmatprep.subr.mxu0 0.0
      %1112 = vmatpush1.xpose.msra.mxu0 0.0
      %1113 = vmatprep.subr.mxu0 0.0
      %1114 = vmatpush1.xpose.msra.mxu0 0.0
      %1115 = vmatprep.subr.mxu0 0.0
      %1116 = vmatpush1.xpose.msra.mxu0 0.0
      %1117 = vmatprep.subr.mxu0 0.0
      %1118 = vmatpush1.xpose.msra.mxu0 0.0
      %1119 = vmatprep.subr.mxu0 0.0
      %1120 = vmatpush1.xpose.msra.mxu0 0.0
      %1121 = vmatprep.subr.mxu0 0.0
      %1122 = vmatpush1.xpose.msra.mxu0 0.0
      %1123 = vmatprep.subr.mxu0 0.0
      %1124 = vmatpush1.xpose.msra.mxu0 0.0
      %1125 = vmatprep.subr.mxu0 0.0
      %1126 = vmatpush1.xpose.msra.mxu0 0.0
      %1127 = vmatprep.subr.mxu0 0.0
      %1128 = vmatpush1.xpose.msra.mxu0 0.0
      %1129 = vmatprep.subr.mxu0 0.0
      %1130 = vmatpush1.xpose.msra.mxu0 0.0
      %1131 = vmatprep.subr.mxu0 0.0
      %1132 = vmatpush1.xpose.msra.mxu0 0.0
      %1133 = vmatprep.subr.mxu0 0.0
      %1134 = vmatpush1.xpose.msra.mxu0 0.0
      %1135 = vmatprep.subr.mxu0 0.0
      %1136 = vmatpush1.xpose.msra.mxu0 0.0
      %1137 = vmatprep.subr.mxu0 0.0
      %1138 = vmatpush1.xpose.msra.mxu0 0.0
      %1139 = vmatprep.subr.mxu0 0.0
      %1140 = vmatpush1.xpose.msra.mxu0 0.0
      %1141 = vmatprep.subr.mxu0 0.0
      %1142 = vmatpush1.xpose.msra.mxu0 0.0
      %1143 = vmatprep.subr.mxu0 0.0
      %1144 = vmatpush1.xpose.msra.mxu0 0.0
      %1145 = vmatprep.subr.mxu0 0.0
      %1146 = vmatpush1.xpose.msra.mxu0 0.0
      %1147 = vmatprep.subr.mxu0 0.0
      %1148 = vmatpush1.xpose.msra.mxu0 0.0
      %1149 = vmatprep.subr.mxu0 0.0
      %1150 = vmatpush1.xpose.msra.mxu0 0.0
      %1151 = vmatprep.subr.mxu0 0.0
      %1152 = vmatpush1.xpose.msra.mxu0 0.0
      %1153 = vmatprep.mubr.f32.mxu0 0.0
      %1154 = vmatmul.mubr.f32.gmra.mrb[0].mxu0 %v1088
      %v1155 = vpop.f32.mrb[0].mxu0
      %v1156 = vadd.f32 0.0, %v1155
      %v1157 = vpop.f32.mrb[0].mxu0
      %1158 = vdwg.mxu0
      %vm1159 = vcmask 57344
      %v1160 = vsel %vm1159, %v1156, -inf
      %1161 = vmax.xlane.f32.xlu0 %v1160
      %v1162 = vpop.xlane.xlu0 %1161
      %v1163 = vsub.f32 %v1156, %v1162
      %v1164 = vmul.f32 %v1163, 1.442695
      %v1165 = vpow.pop %v1164
      %v1166 = vsel %vm1159, %v1165, 0.0
      %1167 = vadd.xlane.f32.xlu0 %v1166
      %v1168 = vpop.xlane.xlu0 %1167
      %v1169 = vrcp.pop %v1168
      %v1170 = vmul.f32 %v1165, %v1169
      %vm1171 = vcmask 64512
      %v1173 = vsel %vm1171, %v1170, 0
      %1175 = vmatprep.subr.mxu0 0.0
      %1176 = vmatpush1.msra.mxu0 %v1087
      %1177 = vmatprep.subr.mxu0 0.0
      %1178 = vmatpush1.msra.mxu0 0.0
      %1179 = vmatprep.subr.mxu0 0.0
      %1180 = vmatpush1.msra.mxu0 0.0
      %1181 = vmatprep.subr.mxu0 0.0
      %1182 = vmatpush1.msra.mxu0 0.0
      %1183 = vmatprep.subr.mxu0 0.0
      %1184 = vmatpush1.msra.mxu0 0.0
      %1185 = vmatprep.subr.mxu0 0.0
      %1186 = vmatpush1.msra.mxu0 0.0
      %1187 = vmatprep.subr.mxu0 0.0
      %1188 = vmatpush1.msra.mxu0 0.0
      %1189 = vmatprep.subr.mxu0 0.0
      %1190 = vmatpush1.msra.mxu0 0.0
      %1191 = vmatprep.subr.mxu0 0.0
      %1192 = vmatpush1.msra.mxu0 0.0
      %1193 = vmatprep.subr.mxu0 0.0
      %1194 = vmatpush1.msra.mxu0 0.0
      %1195 = vmatprep.subr.mxu0 0.0
      %1196 = vmatpush1.msra.mxu0 0.0
      %1197 = vmatprep.subr.mxu0 0.0
      %1198 = vmatpush1.msra.mxu0 0.0
      %1199 = vmatprep.subr.mxu0 0.0
      %1200 = vmatpush1.msra.mxu0 0.0
      %1201 = vmatprep.subr.mxu0 0.0
      %1202 = vmatpush1.msra.mxu0 0.0
      %1203 = vmatprep.subr.mxu0 0.0
      %1204 = vmatpush1.msra.mxu0 0.0
      %1205 = vmatprep.subr.mxu0 0.0
      %1206 = vmatpush1.msra.mxu0 0.0
      %1207 = vmatprep.subr.mxu0 0.0
      %1208 = vmatpush1.msra.mxu0 0.0
      %1209 = vmatprep.subr.mxu0 0.0
      %1210 = vmatpush1.msra.mxu0 0.0
      %1211 = vmatprep.subr.mxu0 0.0
      %1212 = vmatpush1.msra.mxu0 0.0
      %1213 = vmatprep.subr.mxu0 0.0
      %1214 = vmatpush1.msra.mxu0 0.0
      %1215 = vmatprep.subr.mxu0 0.0
      %1216 = vmatpush1.msra.mxu0 0.0
      %1217 = vmatprep.subr.mxu0 0.0
      %1218 = vmatpush1.msra.mxu0 0.0
      %1219 = vmatprep.subr.mxu0 0.0
      %1220 = vmatpush1.msra.mxu0 0.0
      %1221 = vmatprep.subr.mxu0 0.0
      %1222 = vmatpush1.msra.mxu0 0.0
      %1223 = vmatprep.subr.mxu0 0.0
      %1224 = vmatpush1.msra.mxu0 0.0
      %1225 = vmatprep.subr.mxu0 0.0
      %1226 = vmatpush1.msra.mxu0 0.0
      %1227 = vmatprep.subr.mxu0 0.0
      %1228 = vmatpush1.msra.mxu0 0.0
      %1229 = vmatprep.subr.mxu0 0.0
      %1230 = vmatpush1.msra.mxu0 0.0
      %1231 = vmatprep.subr.mxu0 0.0
      %1232 = vmatpush1.msra.mxu0 0.0
      %1233 = vmatprep.subr.mxu0 0.0
      %1234 = vmatpush1.msra.mxu0 0.0
      %1235 = vmatprep.subr.mxu0 0.0
      %1236 = vmatpush1.msra.mxu0 0.0
      %1237 = vmatprep.subr.mxu0 0.0
      %1238 = vmatpush1.msra.mxu0 0.0
      %1239 = vmatprep.mubr.f32.mxu0 0.0
      %1240 = vmatmul.mubr.f32.gmra.mrb[0].mxu0 %v1173
      %v1241 = vpop.f32.mrb[0].mxu0
      %v1242 = vadd.f32 0.0, %v1241
      %v1243 = vpop.f32.mrb[0].mxu0
      %1244 = vdwg.mxu0
      %v1245 = vld [vmem:[#allocation8] sm:$0xff]
      %v1246 = vld [vmem:[#allocation8 + $0x8] sm:$0xff]
      %v1247 = vld [vmem:[#allocation8 + $0x10] sm:$0xff]
      %v1248 = vld [vmem:[#allocation8 + $0x18] sm:$0xff]
      %v1249 = vld [vmem:[#allocation8 + $0x20] sm:$0xff]
      %v1250 = vld [vmem:[#allocation8 + $0x28] sm:$0xff]
      %v1251 = vld [vmem:[#allocation8 + $0x30] sm:$0xff]
      %v1252 = vld [vmem:[#allocation8 + $0x38] sm:$0xff]
      %v1253 = vld [vmem:[#allocation8 + $0x40] sm:$0xff]
      %v1254 = vld [vmem:[#allocation8 + $0x48] sm:$0xff]
      %v1255 = vld [vmem:[#allocation8 + $0x50] sm:$0xff]
      %v1256 = vld [vmem:[#allocation8 + $0x58] sm:$0xff]
      %v1257 = vld [vmem:[#allocation8 + $0x60] sm:$0xff]
      %v1258 = vld [vmem:[#allocation8 + $0x68] sm:$0xff]
      %v1259 = vld [vmem:[#allocation8 + $0x70] sm:$0xff]
      %v1260 = vld [vmem:[#allocation8 + $0x78] sm:$0xff]
      %v1261 = vld [vmem:[%s4] sm:$0x1]
      %1262 = vmatprep.subr.mxu0 0.0
      %1263 = vmatpush1.msra.mxu0 %v1245
      %1264 = vmatprep.subr.mxu0 0.0
      %1265 = vmatpush1.msra.mxu0 %v1246
      %1266 = vmatprep.subr.mxu0 0.0
      %1267 = vmatpush1.msra.mxu0 %v1247
      %1268 = vmatprep.subr.mxu0 0.0
      %1269 = vmatpush1.msra.mxu0 %v1248
      %1270 = vmatprep.subr.mxu0 0.0
      %1271 = vmatpush1.msra.mxu0 %v1249
      %1272 = vmatprep.subr.mxu0 0.0
      %1273 = vmatpush1.msra.mxu0 %v1250
      %1274 = vmatprep.subr.mxu0 0.0
      %1275 = vmatpush1.msra.mxu0 %v1251
      %1276 = vmatprep.subr.mxu0 0.0
      %1277 = vmatpush1.msra.mxu0 %v1252
      %1278 = vmatprep.subr.mxu0 0.0
      %1279 = vmatpush1.msra.mxu0 %v1253
      %1280 = vmatprep.subr.mxu0 0.0
      %1281 = vmatpush1.msra.mxu0 %v1254
      %1282 = vmatprep.subr.mxu0 0.0
      %1283 = vmatpush1.msra.mxu0 %v1255
      %1284 = vmatprep.subr.mxu0 0.0
      %1285 = vmatpush1.msra.mxu0 %v1256
      %1286 = vmatprep.subr.mxu0 0.0
      %1287 = vmatpush1.msra.mxu0 %v1257
      %1288 = vmatprep.subr.mxu0 0.0
      %1289 = vmatpush1.msra.mxu0 %v1258
      %1290 = vmatprep.subr.mxu0 0.0
      %1291 = vmatpush1.msra.mxu0 %v1259
      %1292 = vmatprep.subr.mxu0 0.0
      %1293 = vmatpush1.msra.mxu0 %v1260
      %1294 = vmatprep.subr.mxu0 0.0
      %1295 = vmatpush1.msra.mxu0 0.0
      %1296 = vmatprep.subr.mxu0 0.0
      %1297 = vmatpush1.msra.mxu0 0.0
      %1298 = vmatprep.subr.mxu0 0.0
      %1299 = vmatpush1.msra.mxu0 0.0
      %1300 = vmatprep.subr.mxu0 0.0
      %1301 = vmatpush1.msra.mxu0 0.0
      %1302 = vmatprep.subr.mxu0 0.0
      %1303 = vmatpush1.msra.mxu0 0.0
      %1304 = vmatprep.subr.mxu0 0.0
      %1305 = vmatpush1.msra.mxu0 0.0
      %1306 = vmatprep.subr.mxu0 0.0
      %1307 = vmatpush1.msra.mxu0 0.0
      %1308 = vmatprep.subr.mxu0 0.0
      %1309 = vmatpush1.msra.mxu0 0.0
      %1310 = vmatprep.subr.mxu0 0.0
      %1311 = vmatpush1.msra.mxu0 0.0
      %1312 = vmatprep.subr.mxu0 0.0
      %1313 = vmatpush1.msra.mxu0 0.0
      %1314 = vmatprep.subr.mxu0 0.0
      %1315 = vmatpush1.msra.mxu0 0.0
      %1316 = vmatprep.subr.mxu0 0.0
      %1317 = vmatpush1.msra.mxu0 0.0
      %1318 = vmatprep.subr.mxu0 0.0
      %1319 = vmatpush1.msra.mxu0 0.0
      %1320 = vmatprep.subr.mxu0 0.0
      %1321 = vmatpush1.msra.mxu0 0.0
      %1322 = vmatprep.subr.mxu0 0.0
      %1323 = vmatpush1.msra.mxu0 0.0
      %1324 = vmatprep.subr.mxu0 0.0
      %1325 = vmatpush1.msra.mxu0 0.0
      %1326 = vmatprep.mubr.f32.mxu0 0.0
      %1327 = vmatmul.mubr.f32.gmra.mrb[0].mxu0 %v1242
      %v1328 = vpop.f32.mrb[0].mxu0
      %v1329 = vadd.f32 %v1261, %v1328
      %v1330 = vpop.f32.mrb[0].mxu0
      %1331 = vdwg.mxu0
      %1332 = vst [vmem:[#allocation9] sm:$0x1] %v1329
    $region41: #{tpu_custom_call.1} parent=1 // pred_fallthru
      _
    // Predicated region
    $region42: #{tpu_custom_call.1} parent=1 // pred_check
      _
    $region43: #{tpu_custom_call.1} parent=1 // pred_check_branch
      %1334 = sbr.rel (0) target = $region45
    $region44: #{tpu_custom_call.1} parent=1 // pred_region
      %s1336 = ssub.s32 16, 16
      %1337 = vsyncadd [#allocation5], %s1336
      %s1339 = sshll.u32 [#allocation9], 4
      %s1340 = int_to_ptr.vmem [resolvable:$true] %s1339
      %1342 = dma.vmem_to_hbm [thread:$0]  %s1340, 16, %s5, [#allocation5]
    $region45: #{tpu_custom_call.1} parent=1 // pred_fallthru
      _
    // Predicated region
    $region46: #{tpu_custom_call.1} parent=1 // pred_check
      _
    $region47: #{tpu_custom_call.1} parent=1 // pred_check_branch
      %1344 = sbr.rel (0) target = $region49
    $region48: #{tpu_custom_call.1} parent=1 // pred_region
      %1345 = dma.done [#allocation5], 16
    $region49: #{tpu_custom_call.1} parent=1 // pred_fallthru
      _
    %1346 = vsyncpa [#allocation4], 1
    %1347 = vsyncpa [#allocation7], 1
    %1348 = vsyncpa [#allocation5], 1

</llo_original>
